<compile_context>
chip_gen: v7x
topology: tpu7x:2x2x1
jax: 0.10.0
libtpu: 0.0.40
codegen_flags: <defaults>
</compile_context>

<pallas_src>
import functools

import numpy as np
import jax
import jax.numpy as jnp
from jax.experimental import pallas as pl
from jax.experimental.pallas import tpu as pltpu


# ----------------------------------------------------------------------------
# host-side helpers
# ----------------------------------------------------------------------------
def _build_tap_masks(H, W, b_blk):
    """mask[k, p] == 1 iff the 3x3 tap k = ky*3+kx reads an in-bounds pixel for
    destination pixel p (row-major [H*W], tiled b_blk times along the batch-
    folded lane axis).  Zeros exactly the wrap-around columns of the rolls."""
    hw = H * W
    ys, xs = np.meshgrid(np.arange(H), np.arange(W), indexing="ij")
    ys = ys.reshape(-1)
    xs = xs.reshape(-1)
    masks = np.zeros((9, b_blk * hw), np.float32)
    for ky in range(3):
        for kx in range(3):
            k = ky * 3 + kx
            sy, sx = ky - 1, kx - 1
            valid = ((ys + sy >= 0) & (ys + sy < H)
                     & (xs + sx >= 0) & (xs + sx < W)).astype(np.float32)
            masks[k] = np.tile(valid, b_blk)
    return jnp.asarray(masks)


# ----------------------------------------------------------------------------
# Pallas kernels
# ----------------------------------------------------------------------------
def srn_branch_kernel(feat_ref, wcat_ref, bcat_ref, w2cat_ref, b2_ref,
                      w3_ref, b3_ref, mask_ref, out_ref,
                      *, hidden, ncls, hw, b_blk, W):
    """One batch chunk of: SRN (fused 1x1 convs -> 3x3 conv via rolls+stacked
    matmul -> ReLU -> 1x1 conv, spatial softmax, sigmoid confidence gate,
    elementwise product), full-window AvgPool2d and the branch sigmoid."""
    n = b_blk * hw
    x = feat_ref[...]                                            # [C, n]

    # fused 1x1 convs: [w1; wc] @ x + [b1; bc]   (x streamed through MXU once)
    y = jnp.dot(wcat_ref[...], x,
                preferred_element_type=jnp.float32) + bcat_ref[...]
    h1 = y[:hidden, :]                                           # [hidden, n]
    conf_logits = y[hidden:, :]                                  # [ncls, n]

    # 3x3 conv, padding=1: 9 lane-rotations (XLU, co-issues with MXU) stacked
    # into [9*hidden, n], contracted in a single K=9*hidden matmul.
    masks = mask_ref[...]                                        # [9, n]
    taps = []
    for ky in range(3):
        for kx in range(3):
            k = ky * 3 + kx
            off = (ky - 1) * W + (kx - 1)     # source pixel offset for tap k
            s = h1 if off == 0 else pltpu.roll(h1, (-off) % n, axis=1)
            taps.append(s * masks[k:k + 1, :])
    h9 = jnp.concatenate(taps, axis=0)                           # [9*hidden, n]
    h2 = jnp.maximum(
        jnp.dot(w2cat_ref[...], h9, preferred_element_type=jnp.float32)
        + b2_ref[...], 0.0)                                      # [hidden, n]

    # attn_map[3]: 1x1 conv (hidden -> num_classes), softmax over spatial
    logits = jnp.dot(w3_ref[...], h2,
                     preferred_element_type=jnp.float32) + b3_ref[...]
    logits = logits.reshape(ncls, b_blk, hw)
    logits = logits - jnp.max(logits, axis=-1, keepdims=True)
    e = jnp.exp(logits)
    attn = e * pl.reciprocal(jnp.sum(e, axis=-1, keepdims=True), approx=True)

    # confidence gate (bias already folded into the fused matmul)
    conf = jax.nn.sigmoid(conf_logits).reshape(ncls, b_blk, hw)

    # AvgPool2d(H, H) over the full map == mean over spatial, then sigmoid
    pooled = jnp.sum(attn * conf, axis=-1) * (1.0 / hw)          # [ncls, b_blk]
    out_ref[...] = jax.nn.sigmoid(pooled).reshape(1, ncls, b_blk)


def classifier_kernel(x_ref, w_ref, b_ref, out_ref):
    """global logits = x @ W.T + b, then sigmoid."""
    logits = jax.lax.dot_general(
        x_ref[...], w_ref[...],
        dimension_numbers=(((1,), (1,)), ((), ())),
        preferred_element_type=jnp.float32)                      # [B, ncls]
    out_ref[...] = jax.nn.sigmoid(logits + b_ref[...])


def fuse_kernel(g_ref, b1_ref, b2_ref, out_ref, *, scale):
    out_ref[...] = (g_ref[...] + b1_ref[...] + b2_ref[...]) * scale


# ----------------------------------------------------------------------------
# wrappers
# ----------------------------------------------------------------------------
def srn_branch_pallas(feat, p):
    B, C, H, W = feat.shape
    HW = H * W
    hidden = p["w1"].shape[0]
    ncls = p["w3"].shape[0]

    # batch chunking: fold batch into the lane axis; keep (at most) a size-2
    # "parallel" grid axis so v7x megacore still splits work.
    b_blk = B // 2 if (B >= 2 and B % 2 == 0) else B
    g = B // b_blk
    n = b_blk * HW
    # NOTE: HW is a multiple of 128 at these sizes; at production sizes
    # (28x28 -> 784) pad HW to 896 explicitly and mask the softmax/pool.

    # [B,C,H,W] -> [C, B*HW]   (batch-major along the lane axis)
    feat_cm = jnp.transpose(feat, (1, 0, 2, 3)).reshape(C, B * HW)

    # fuse the two 1x1 convs that read the same x
    wcat = jnp.concatenate([p["w1"], p["wc"]], axis=0)                  # [hidden+ncls, C]
    bcat = jnp.concatenate([p["b1"], p["bc"]], axis=0).reshape(-1, 1)   # [hidden+ncls, 1]
    # [O,I,3,3] -> [O, 9*I] with column k*I+i, k = ky*3+kx (matches tap stack)
    w2cat = jnp.transpose(p["w2"], (0, 2, 3, 1)).reshape(hidden, 9 * hidden)
    masks = _build_tap_masks(H, W, b_blk)

    kern = functools.partial(srn_branch_kernel, hidden=hidden, ncls=ncls,
                             hw=HW, b_blk=b_blk, W=W)
    out = pl.pallas_call(
        kern,
        out_shape=jax.ShapeDtypeStruct((g, ncls, b_blk), jnp.float32),
        grid=(g,),
        in_specs=[
            pl.BlockSpec((C, n), lambda i: (0, i)),
            pl.BlockSpec((hidden + ncls, C), lambda i: (0, 0)),
            pl.BlockSpec((hidden + ncls, 1), lambda i: (0, 0)),
            pl.BlockSpec((hidden, 9 * hidden), lambda i: (0, 0)),
            pl.BlockSpec((hidden, 1), lambda i: (0, 0)),
            pl.BlockSpec((ncls, hidden), lambda i: (0, 0)),
            pl.BlockSpec((ncls, 1), lambda i: (0, 0)),
            pl.BlockSpec((9, n), lambda i: (0, 0)),
        ],
        out_specs=pl.BlockSpec((1, ncls, b_blk), lambda i: (i, 0, 0)),
        compiler_params=pltpu.CompilerParams(
            dimension_semantics=("parallel",)),
    )(feat_cm, wcat, bcat, w2cat, p["b2"].reshape(hidden, 1), p["w3"],
      p["b3"].reshape(ncls, 1), masks)

    # (g, ncls, b_blk) -> (B, ncls)
    return jnp.transpose(out, (0, 2, 1)).reshape(B, ncls)


def classifier_pallas(x, w, b):
    B = x.shape[0]
    ncls = w.shape[0]
    return pl.pallas_call(
        classifier_kernel,
        out_shape=jax.ShapeDtypeStruct((B, ncls), jnp.float32),
    )(x, w, b.reshape(1, ncls))


def fuse_pallas(g, br1, br2, scale):
    kern = functools.partial(fuse_kernel, scale=scale)
    return pl.pallas_call(
        kern, out_shape=jax.ShapeDtypeStruct(g.shape, jnp.float32)
    )(g, br1, br2)


def attn_mlc_forward_pallas(final_layout, feats, params):
    """AttnMLC.forward on top of precomputed backbone outputs."""
    global_pred = classifier_pallas(final_layout, params["cls_w"], params["cls_b"])
    branch_preds = [srn_branch_pallas(f, params["srn"][i]) for i, f in enumerate(feats)]
    total = fuse_pallas(global_pred, branch_preds[0], branch_preds[1],
                        1.0 / (1 + len(feats)))
    return total, feats


# ----------------------------------------------------------------------------
# pure-JAX reference (for correctness check)
# ----------------------------------------------------------------------------
def _srn_branch_ref(feat, p):
    hi = jax.lax.Precision.HIGHEST
    B, C, H, W = feat.shape
    h1 = jnp.einsum("bchw,oc->bohw", feat, p["w1"], precision=hi) \
        + p["b1"][None, :, None, None]
    h2 = jax.lax.conv_general_dilated(
        h1, p["w2"], (1, 1), ((1, 1), (1, 1)),
        dimension_numbers=("NCHW", "OIHW", "NCHW"), precision=hi) \
        + p["b2"][None, :, None, None]
    h2 = jax.nn.relu(h2)
    attn = jnp.einsum("bchw,oc->bohw", h2, p["w3"], precision=hi) \
        + p["b3"][None, :, None, None]
    nc = attn.shape[1]
    attn = jax.nn.softmax(attn.reshape(B, nc, -1), axis=2).reshape(B, nc, H, W)
    conf = jax.nn.sigmoid(jnp.einsum("bchw,oc->bohw", feat, p["wc"], precision=hi)
                          + p["bc"][None, :, None, None])
    pooled = (attn * conf).mean(axis=(2, 3))
    return jax.nn.sigmoid(pooled)


def _attn_mlc_forward_ref(final_layout, feats, params):
    hi = jax.lax.Precision.HIGHEST
    g = jax.nn.sigmoid(jnp.dot(final_layout, params["cls_w"].T, precision=hi)
                       + params["cls_b"][None, :])
    total = g
    for i, f in enumerate(feats):
        total = total + _srn_branch_ref(f, params["srn"][i])
    return total / (1 + len(feats))


# ----------------------------------------------------------------------------
# deterministic parameter init (shapes follow the module __init__, scaled down)
# ----------------------------------------------------------------------------
def _init_srn_params(key, C, hidden, ncls, scale=0.05):
    ks = jax.random.split(key, 8)
    return dict(
        w1=jax.random.normal(ks[0], (hidden, C), jnp.float32) * scale,
        b1=jax.random.normal(ks[1], (hidden,), jnp.float32) * scale,
        w2=jax.random.normal(ks[2], (hidden, hidden, 3, 3), jnp.float32) * scale,
        b2=jax.random.normal(ks[3], (hidden,), jnp.float32) * scale,
        w3=jax.random.normal(ks[4], (ncls, hidden), jnp.float32) * scale,
        b3=jax.random.normal(ks[5], (ncls,), jnp.float32) * scale,
        wc=jax.random.normal(ks[6], (ncls, C), jnp.float32) * scale,
        bc=jax.random.normal(ks[7], (ncls,), jnp.float32) * scale,
    )


if __name__ == "__main__":
    key = jax.random.PRNGKey(0)

    # small stand-in sizes (original: num_features=2048, srn in=1024/2048,
    # hidden=256, spatial 28x28 / 14x14)
    B = 2
    NUM_CLASSES = 8
    NUM_FEATURES = 256
    HIDDEN = 32
    C1, H1, W1 = 64, 16, 16     # stand-in for resnet layer3 feature map
    C2, H2, W2 = 128, 16, 16    # stand-in for resnet layer4 feature map

    k_feat, k_par = jax.random.split(key)
    kf = jax.random.split(k_feat, 3)
    # synthesized backbone outputs (see TODO(synk) above)
    final_layout = jax.random.normal(kf[0], (B, NUM_FEATURES), jnp.float32)
    feat1 = jax.random.normal(kf[1], (B, C1, H1, W1), jnp.float32)
    feat2 = jax.random.normal(kf[2], (B, C2, H2, W2), jnp.float32)
    feats = [feat1, feat2]

    kp = jax.random.split(k_par, 4)
    params = dict(
        cls_w=jax.random.normal(kp[0], (NUM_CLASSES, NUM_FEATURES), jnp.float32) * 0.05,
        cls_b=jax.random.normal(kp[1], (NUM_CLASSES,), jnp.float32) * 0.05,
        srn=[
            _init_srn_params(kp[2], C1, HIDDEN, NUM_CLASSES),
            _init_srn_params(kp[3], C2, HIDDEN, NUM_CLASSES),
        ],
    )

    total_pred, out_feats = attn_mlc_forward_pallas(final_layout, feats, params)
    total_pred = jax.block_until_ready(total_pred)

    ref = np.asarray(_attn_mlc_forward_ref(final_layout, feats, params))
    np.testing.assert_allclose(np.asarray(total_pred), ref, rtol=1e-3, atol=1e-3)

    print("KERNEL_OK")
</pallas_src>

<mosaic_0001>
module attributes {stable_mosaic.version = 11 : i64} {
  func.func @classifier_kernel(%arg0: memref<2x256xf32, #tpu.memory_space<vmem>>, %arg1: memref<8x256xf32, #tpu.memory_space<vmem>>, %arg2: memref<1x8xf32, #tpu.memory_space<vmem>>, %arg3: memref<2x8xf32, #tpu.memory_space<vmem>>) attributes {dimension_semantics = [], scalar_prefetch = 0 : i64, scratch_operands = 0 : i64, tpu.core_type = #tpu.core_type<tc>} {
    %c0 = arith.constant 0 : index
    %c0_0 = arith.constant 0 : index
    %0 = vector.load %arg0[%c0, %c0_0] : memref<2x256xf32, #tpu.memory_space<vmem>>, vector<2x256xf32>
    %c0_1 = arith.constant 0 : index
    %c0_2 = arith.constant 0 : index
    %1 = vector.load %arg1[%c0_1, %c0_2] : memref<8x256xf32, #tpu.memory_space<vmem>>, vector<8x256xf32>
    %cst = arith.constant dense<0.000000e+00> : vector<2x8xf32>
    %2 = tpu.matmul %0, %1, %cst {dimension_numbers = #tpu.dot_dimension_numbers<[1], [1], [0], [0], [0, 0, 1, 0], [], []>} : vector<2x256xf32>, vector<8x256xf32>, vector<2x8xf32> -> vector<2x8xf32>
    %c0_3 = arith.constant 0 : index
    %c0_4 = arith.constant 0 : index
    %3 = vector.load %arg2[%c0_3, %c0_4] : memref<1x8xf32, #tpu.memory_space<vmem>>, vector<1x8xf32>
    %4 = vector.broadcast %3 : vector<1x8xf32> to vector<2x8xf32>
    %5 = arith.addf %2, %4 : vector<2x8xf32>
    %6 = arith.negf %5 : vector<2x8xf32>
    %7 = math.exp %6 : vector<2x8xf32>
    %cst_5 = arith.constant 1.000000e+00 : f32
    %8 = vector.broadcast %cst_5 : f32 to vector<2x8xf32>
    %9 = arith.addf %8, %7 : vector<2x8xf32>
    %10 = arith.divf %8, %9 : vector<2x8xf32>
    %c0_6 = arith.constant 0 : index
    %c0_7 = arith.constant 0 : index
    %11 = vector.load %arg3[%c0_6, %c0_7] : memref<2x8xf32, #tpu.memory_space<vmem>>, vector<2x8xf32>
    tpu.vector_store %arg3[%c0_6, %c0_7], %10 {strides = array<i32>} : memref<2x8xf32, #tpu.memory_space<vmem>>, vector<2x8xf32>,
    return
  }
}

</mosaic_0001>

<llo_original>
// kernel: tpu_custom_call.1
$region0: #{tpu_custom_call.1}
  #allocation0 [shape = 'u32[]', space=smem, size = 0x4, offset = 0x4, fixed_abs, tag = 'smem constant byte address 0x4 - core index']
  #allocation1 [shape = 'u32[144,128]{1,0:T(1,128)}', space=vmem, size = 0x12000, scoped, tag = 'internal scratch']
  %s0 = inlined_call_operand.hbm [shape: f32[2,256], index: 0, kind: input, shape index: {}]
  %s1 = inlined_call_operand.hbm [shape: f32[8,256], index: 1, kind: input, shape index: {}]
  %s2 = inlined_call_operand.vmem [shape: f32[1,8], index: 2, kind: input, shape index: {}]
  %s3 = inlined_call_operand.hbm [shape: f32[2,8], index: 3, kind: output, shape index: {}]
  %s4 = sld [smem:[#allocation0]]
  $region30: #{tpu_custom_call.1} parent=0
    _
  %s6 = ssub.s32 1, %s4
  %s7 = scalar_select 0, %s6, %s4
  $region1: #{tpu_custom_call.1} parent=0
    #allocation2 [shape = 'u8[2048]{0}', space=vmem, size = 0x800, scoped, tag = 'input window, operand 0, single buffered']
    #allocation3 [shape = 's32[1]{0}', space=sflag, size = 0x4, scoped, tag = 'scoped memory for tpu_custom_call.1']
    #allocation4 [shape = 's32[1]{0}', space=sflag, size = 0x4, scoped, tag = 'scoped memory for tpu_custom_call.1']
    #allocation5 [shape = 'u8[8192]{0}', space=vmem, size = 0x2000, scoped, tag = 'input window, operand 1, single buffered']
    #allocation6 [shape = 's32[1]{0}', space=sflag, size = 0x4, scoped, tag = 'scoped memory for tpu_custom_call.1']
    #allocation7 [shape = 'u8[1024]{0}', space=vmem, size = 0x400, scoped, tag = 'output window, operand 0, single buffered']
    %8 = vsyncpa [#allocation3], 0
    %9 = vsyncpa [#allocation6], 0
    %10 = vsyncpa [#allocation4], 0
    // Predicated region
    $region2: #{tpu_custom_call.1} parent=1 // pred_check
      _
    $region3: #{tpu_custom_call.1} parent=1 // pred_check_branch
      %12 = sbr.rel (0) target = $region5
    $region4: #{tpu_custom_call.1} parent=1 // pred_region
      %s14 = ssub.s32 64, 64
      %15 = vsyncadd [#allocation3], %s14
      %s17 = sshll.u32 [#allocation2], 4
      %s18 = int_to_ptr.vmem [resolvable:$true] %s17
      %20 = dma.hbm_to_vmem [thread:$0]  %s0, 64, %s18, [#allocation3]
    $region5: #{tpu_custom_call.1} parent=1 // pred_fallthru
      _
    // Predicated region
    $region6: #{tpu_custom_call.1} parent=1 // pred_check
      _
    $region7: #{tpu_custom_call.1} parent=1 // pred_check_branch
      %22 = sbr.rel (0) target = $region9
    $region8: #{tpu_custom_call.1} parent=1 // pred_region
      %s24 = ssub.s32 256, 256
      %25 = vsyncadd [#allocation6], %s24
      %s27 = sshll.u32 [#allocation5], 4
      %s28 = int_to_ptr.vmem [resolvable:$true] %s27
      %30 = dma.hbm_to_vmem [thread:$0]  %s1, 256, %s28, [#allocation6]
    $region9: #{tpu_custom_call.1} parent=1 // pred_fallthru
      _
    // Predicated region
    $region10: #{tpu_custom_call.1} parent=1 // pred_check
      _
    $region11: #{tpu_custom_call.1} parent=1 // pred_check_branch
      %32 = sbr.rel (0) target = $region13
    $region12: #{tpu_custom_call.1} parent=1 // pred_region
      _
    $region13: #{tpu_custom_call.1} parent=1 // pred_fallthru
      _
    // Predicated region
    $region14: #{tpu_custom_call.1} parent=1 // pred_check
      _
    $region15: #{tpu_custom_call.1} parent=1 // pred_check_branch
      %34 = sbr.rel (0) target = $region17
    $region16: #{tpu_custom_call.1} parent=1 // pred_region
      %35 = dma.done [#allocation3], 64
    $region17: #{tpu_custom_call.1} parent=1 // pred_fallthru
      _
    // Predicated region
    $region18: #{tpu_custom_call.1} parent=1 // pred_check
      _
    $region19: #{tpu_custom_call.1} parent=1 // pred_check_branch
      %37 = sbr.rel (0) target = $region21
    $region20: #{tpu_custom_call.1} parent=1 // pred_region
      %38 = dma.done [#allocation6], 256
    $region21: #{tpu_custom_call.1} parent=1 // pred_fallthru
      _
    %v39 = vld [vmem:[#allocation2] sm:$0xf]
    %v40 = vld [vmem:[#allocation5] sm:$0xff]
    %v41 = vld [vmem:[#allocation5 + $0x8] sm:$0xff]
    %v42 = vld [vmem:[%s2] sm:$0x1]
    %v44 = vlaneseq
    %v45 = vshrl.u32 %v44, 7
    %v46 = vsub.s32 0, %v45
    %v47 = vrot.slane %v42, %v46
    %v51 = vunpack.c.l.s4 1983009808
    %v52 = vunpack.c.0.s8 %v51
    %v53 = vlaneseq
    %v54 = vshrl.u32 %v53, 7
    %v55 = vsub.s32 %v52, %v54
    %v56 = vrot.slane %v39, %v55
    %v57 = vcombine.high %v56, %v56
    %60 = vmatprep.subr.mxu0 %v41
    %61 = vmatpush1.xpose.msra.mxu0 %v40
    %62 = vmatprep.subr.mxu0 0.0
    %63 = vmatpush1.xpose.msra.mxu0 0.0
    %64 = vmatprep.subr.mxu0 0.0
    %65 = vmatpush1.xpose.msra.mxu0 0.0
    %66 = vmatprep.subr.mxu0 0.0
    %67 = vmatpush1.xpose.msra.mxu0 0.0
    %68 = vmatprep.subr.mxu0 0.0
    %69 = vmatpush1.xpose.msra.mxu0 0.0
    %70 = vmatprep.subr.mxu0 0.0
    %71 = vmatpush1.xpose.msra.mxu0 0.0
    %72 = vmatprep.subr.mxu0 0.0
    %73 = vmatpush1.xpose.msra.mxu0 0.0
    %74 = vmatprep.subr.mxu0 0.0
    %75 = vmatpush1.xpose.msra.mxu0 0.0
    %76 = vmatprep.subr.mxu0 0.0
    %77 = vmatpush1.xpose.msra.mxu0 0.0
    %78 = vmatprep.subr.mxu0 0.0
    %79 = vmatpush1.xpose.msra.mxu0 0.0
    %80 = vmatprep.subr.mxu0 0.0
    %81 = vmatpush1.xpose.msra.mxu0 0.0
    %82 = vmatprep.subr.mxu0 0.0
    %83 = vmatpush1.xpose.msra.mxu0 0.0
    %84 = vmatprep.subr.mxu0 0.0
    %85 = vmatpush1.xpose.msra.mxu0 0.0
    %86 = vmatprep.subr.mxu0 0.0
    %87 = vmatpush1.xpose.msra.mxu0 0.0
    %88 = vmatprep.subr.mxu0 0.0
    %89 = vmatpush1.xpose.msra.mxu0 0.0
    %90 = vmatprep.subr.mxu0 0.0
    %91 = vmatpush1.xpose.msra.mxu0 0.0
    %92 = vmatprep.subr.mxu0 0.0
    %93 = vmatpush1.xpose.msra.mxu0 0.0
    %94 = vmatprep.subr.mxu0 0.0
    %95 = vmatpush1.xpose.msra.mxu0 0.0
    %96 = vmatprep.subr.mxu0 0.0
    %97 = vmatpush1.xpose.msra.mxu0 0.0
    %98 = vmatprep.subr.mxu0 0.0
    %99 = vmatpush1.xpose.msra.mxu0 0.0
    %100 = vmatprep.subr.mxu0 0.0
    %101 = vmatpush1.xpose.msra.mxu0 0.0
    %102 = vmatprep.subr.mxu0 0.0
    %103 = vmatpush1.xpose.msra.mxu0 0.0
    %104 = vmatprep.subr.mxu0 0.0
    %105 = vmatpush1.xpose.msra.mxu0 0.0
    %106 = vmatprep.subr.mxu0 0.0
    %107 = vmatpush1.xpose.msra.mxu0 0.0
    %108 = vmatprep.subr.mxu0 0.0
    %109 = vmatpush1.xpose.msra.mxu0 0.0
    %110 = vmatprep.subr.mxu0 0.0
    %111 = vmatpush1.xpose.msra.mxu0 0.0
    %112 = vmatprep.subr.mxu0 0.0
    %113 = vmatpush1.xpose.msra.mxu0 0.0
    %114 = vmatprep.subr.mxu0 0.0
    %115 = vmatpush1.xpose.msra.mxu0 0.0
    %116 = vmatprep.subr.mxu0 0.0
    %117 = vmatpush1.xpose.msra.mxu0 0.0
    %118 = vmatprep.subr.mxu0 0.0
    %119 = vmatpush1.xpose.msra.mxu0 0.0
    %120 = vmatprep.subr.mxu0 0.0
    %121 = vmatpush1.xpose.msra.mxu0 0.0
    %122 = vmatprep.subr.mxu0 0.0
    %123 = vmatpush1.xpose.msra.mxu0 0.0
    %124 = vmatprep.mubr.f32.mxu0 %v57
    %125 = vmatmul.mubr.f32.gmra.mrb[0].mxu0 %v56
    %v126 = vpop.f32.mrb[0].mxu0
    %v127 = vadd.f32 %v47, %v126
    %v128 = vpop.f32.mrb[0].mxu0
    %129 = vdwg.mxu0
    %v130 = vxor.u32 %v127, 2147483648
    %v131 = vmul.f32 %v130, 1.442695
    %v132 = vpow.pop %v131
    %v133 = vadd.f32 %v132, 1.0
    %v134 = vrcp.pop %v133
    %v135 = vmul.f32 1.0, %v134
    %vm136 = vcmask 58368
    %137 = vst.msk [vmem:[#allocation7] sm:$0x3] %vm136, %v135
    // Predicated region
    $region22: #{tpu_custom_call.1} parent=1 // pred_check
      _
    $region23: #{tpu_custom_call.1} parent=1 // pred_check_branch
      %139 = sbr.rel (0) target = $region25
    $region24: #{tpu_custom_call.1} parent=1 // pred_region
      %s141 = ssub.s32 32, 32
      %142 = vsyncadd [#allocation4], %s141
      %s144 = sshll.u32 [#allocation7], 4
      %s145 = int_to_ptr.vmem [resolvable:$true] %s144
      %147 = dma.vmem_to_hbm [thread:$0]  %s145, 32, %s3, [#allocation4]
    $region25: #{tpu_custom_call.1} parent=1 // pred_fallthru
      _
    // Predicated region
    $region26: #{tpu_custom_call.1} parent=1 // pred_check
      _
    $region27: #{tpu_custom_call.1} parent=1 // pred_check_branch
      %149 = sbr.rel (0) target = $region29
    $region28: #{tpu_custom_call.1} parent=1 // pred_region
      %150 = dma.done [#allocation4], 32
    $region29: #{tpu_custom_call.1} parent=1 // pred_fallthru
      _
    %151 = vsyncpa [#allocation3], 1
    %152 = vsyncpa [#allocation6], 1
    %153 = vsyncpa [#allocation4], 1

</llo_original>
